<compile_context>
chip_gen: v7x
topology: tpu7x:2x2x1
jax: 0.10.0
libtpu: 0.0.40
codegen_flags: <defaults>
</compile_context>

<pallas_src>
import functools

import jax
import jax.numpy as jnp
from jax.experimental import pallas as pl
from jax.experimental.pallas import tpu as pltpu

_EPS = 1e-5


def _round_up(x, m):
    return (x + m - 1) // m * m


# ---------------------------------------------------------------------------
# Pass 1: per-tile partial batch statistics of y = x @ W (bias cancels in BN).
# ---------------------------------------------------------------------------
def _stats_kernel(x_ref, w_ref, stats_ref):
    # [tm, in] @ [in, out_pad] on the MXU with f32 accumulation.
    y = jnp.dot(x_ref[...], w_ref[...], preferred_element_type=jnp.float32)
    # Zero-padded batch rows contribute exactly 0 (no bias), so no row mask is needed.
    stats_ref[0:1, :] = jnp.sum(y, axis=0, keepdims=True)       # sum(y)
    stats_ref[1:2, :] = jnp.sum(y * y, axis=0, keepdims=True)   # sum(y^2)


# ---------------------------------------------------------------------------
# Pass 2: recompute x @ W, apply folded BN scale/shift, ReLU, lane-masked softmax.
# ---------------------------------------------------------------------------
def _bn_relu_softmax_kernel(x_ref, w_ref, ss_ref, o_ref, *, n_valid_cols):
    y = jnp.dot(x_ref[...], w_ref[...], preferred_element_type=jnp.float32)

    # BatchNorm folded into a single scale/shift (computed once in the wrapper).
    scale = ss_ref[0:1, :]
    shift = ss_ref[1:2, :]
    r = jnp.maximum(y * scale + shift, 0.0)                       # ReLU

    # Padded feature columns must contribute exactly 0 to the softmax.
    if n_valid_cols != r.shape[1]:  # static: lane padding exists
        col = jax.lax.broadcasted_iota(jnp.int32, r.shape, 1)
        r = jnp.where(col < n_valid_cols, r, -jnp.inf)

    # Softmax over the feature dim, numerically stabilized.
    m = jnp.max(r, axis=1, keepdims=True)
    e = jnp.exp(r - m)
    denom = jnp.sum(e, axis=1, keepdims=True)
    # EUP approximate reciprocal + one Newton step (keeps divide off the VPU critical path).
    inv = pl.reciprocal(denom, approx=True)
    inv = inv * (2.0 - denom * inv)
    o_ref[...] = (e * inv).astype(o_ref.dtype)


# ---------------------------------------------------------------------------
# Wrapper: padding, tile sizing, two pallas_calls + tiny BN fold in between.
# ---------------------------------------------------------------------------
def budget_policy_forward(x, w, b, gamma, beta, *, block_rows=512,
                          matmul_dtype=jnp.bfloat16, out_dtype=jnp.float32):
    """BudgetPolicy forward (training-mode BatchNorm semantics).

    x:            [B, input_dim]
    w:            [input_dim, out_dim]   (PyTorch fc.weight transposed)
    b:            [1, out_dim]  -- accepted for API parity, but it is a mathematical
                  no-op: BatchNorm(train) subtracts the batch mean which absorbs the
                  bias exactly, so it is not fed to the kernels.
    gamma, beta:  [out_dim] or [1, out_dim]  BatchNorm affine parameters.
    Returns:      [B, out_dim] softmax probabilities (rows sum to 1).
    """
    del b  # cancels exactly under training-mode BatchNorm.

    x = jnp.asarray(x, jnp.float32)
    w = jnp.asarray(w, jnp.float32)
    gamma = jnp.reshape(jnp.asarray(gamma, jnp.float32), (1, -1))
    beta = jnp.reshape(jnp.asarray(beta, jnp.float32), (1, -1))

    B, in_dim = x.shape
    out_dim = w.shape[1]
    out_pad = _round_up(out_dim, 128)          # lane-dense feature dim

    mm_isz = jnp.dtype(matmul_dtype).itemsize
    out_isz = jnp.dtype(out_dtype).itemsize

    # ---- row-tile sizing against a conservative VMEM budget (v5e 16 MiB scoped default,
    # v7x 64 MiB total): double-buffered x/out tiles + f32 in-kernel temps + resident W. ----
    resident_bytes = 2 * in_dim * out_pad * mm_isz + 2 * 2 * out_pad * 4
    row_bytes = 2 * in_dim * mm_isz + 2 * out_pad * out_isz + 2 * out_pad * 4
    budget = 12 * 1024 * 1024 - resident_bytes
    if budget > 8 * row_bytes:
        tm = max(8, (budget // row_bytes) // 8 * 8)
    else:
        tm = 8
    tm = int(min(tm, _round_up(block_rows, 8), _round_up(B, 8)))
    rows_pad = _round_up(B, tm)
    n_tiles = rows_pad // tm

    pad_cols = out_pad - out_dim
    if pad_cols:
        w = jnp.pad(w, ((0, 0), (0, pad_cols)))
        gamma = jnp.pad(gamma, ((0, 0), (0, pad_cols)))
        beta = jnp.pad(beta, ((0, 0), (0, pad_cols)))
    if rows_pad != B:
        x = jnp.pad(x, ((0, rows_pad - B), (0, 0)))

    # bf16 operands feed the native MXU and halve x/W HBM + VMEM traffic (f32 accumulate).
    x_mm = x.astype(matmul_dtype)
    w_mm = w.astype(matmul_dtype)

    grid = (n_tiles,)
    x_spec = pl.BlockSpec((tm, in_dim), lambda i: (i, 0))
    w_spec = pl.BlockSpec((in_dim, out_pad), lambda i: (0, 0))        # VMEM-resident
    ss_spec = pl.BlockSpec((2, out_pad), lambda i: (0, 0))            # VMEM-resident
    out_spec = pl.BlockSpec((tm, out_pad), lambda i: (i, 0))
    stats_spec = pl.BlockSpec((None, 2, out_pad), lambda i: (i, 0, 0))

    # ---- pass 1: per-tile partial statistics (fully parallel; both TCs on v7x) ----
    partial_stats = pl.pallas_call(
        _stats_kernel,
        grid=grid,
        in_specs=[x_spec, w_spec],
        out_specs=stats_spec,
        out_shape=jax.ShapeDtypeStruct((n_tiles, 2, out_pad), jnp.float32),
        compiler_params=pltpu.CompilerParams(dimension_semantics=("parallel",)),
    )(x_mm, w_mm)

    # ---- tiny reduction + BN fold, done ONCE (not per tile) ----
    stats = jnp.sum(partial_stats, axis=0)                     # [2, out_pad]
    mean = stats[0:1, :] * (1.0 / B)
    var = jnp.maximum(stats[1:2, :] * (1.0 / B) - mean * mean, 0.0)   # biased (train)
    scale = gamma * jax.lax.rsqrt(var + _EPS)
    shift = beta - mean * scale
    ss = jnp.concatenate([scale, shift], axis=0)               # [2, out_pad]

    # ---- pass 2: recompute x@W, folded BN, ReLU, lane-masked softmax ----
    out = pl.pallas_call(
        functools.partial(_bn_relu_softmax_kernel, n_valid_cols=out_dim),
        grid=grid,
        in_specs=[x_spec, w_spec, ss_spec],
        out_specs=out_spec,
        out_shape=jax.ShapeDtypeStruct((rows_pad, out_pad), out_dtype),
        compiler_params=pltpu.CompilerParams(dimension_semantics=("parallel",)),
    )(x_mm, w_mm, ss)

    return out[:B, :out_dim]


# ---------------------------------------------------------------------------
# Pure-JAX reference (PyTorch training-mode semantics: batch stats, biased var,
# bias included — demonstrating the bias cancellation used by the kernel).
# ---------------------------------------------------------------------------
def _reference(x, w, b, gamma, beta, matmul_dtype=jnp.float32):
    y = jnp.dot(x.astype(matmul_dtype), w.astype(matmul_dtype),
                preferred_element_type=jnp.float32) + b
    mean = y.mean(axis=0, keepdims=True)
    var = ((y - mean) ** 2).mean(axis=0, keepdims=True)
    z = (y - mean) / jnp.sqrt(var + _EPS) * gamma + beta
    r = jnp.maximum(z, 0.0)
    return jax.nn.softmax(r, axis=1)


def _check(B, in_dim, out_dim, block_rows, key, matmul_dtype, atol):
    kx, kw, kb, kg, kbe = jax.random.split(key, 5)
    bound = 1.0 / (in_dim ** 0.5)
    x = jax.random.normal(kx, (B, in_dim), jnp.float32)
    w = jax.random.uniform(kw, (in_dim, out_dim), jnp.float32, -bound, bound)
    b = jax.random.uniform(kb, (1, out_dim), jnp.float32, -bound, bound)
    gamma = jax.random.uniform(kg, (1, out_dim), jnp.float32, 0.5, 1.5)
    beta = 0.1 * jax.random.normal(kbe, (1, out_dim), jnp.float32)

    out = jax.block_until_ready(
        budget_policy_forward(x, w, b, gamma, beta, block_rows=block_rows,
                              matmul_dtype=matmul_dtype))

    assert out.shape == (B, out_dim)
    # Same-matmul-precision reference: tight tolerance.
    ref = _reference(x, w, b, gamma, beta, matmul_dtype=matmul_dtype)
    assert jnp.allclose(out, ref, atol=atol, rtol=atol), "mismatch vs reference"
    # Pure-f32 PyTorch-style reference (bias included): validates semantics incl.
    # the bias-cancellation; loose tolerance covers the bf16-operand matmul path.
    ref32 = _reference(x, w, b, gamma, beta, matmul_dtype=jnp.float32)
    assert jnp.allclose(out, ref32, atol=5e-3, rtol=5e-3), "mismatch vs f32 reference"
    assert jnp.allclose(out.sum(axis=1), 1.0, atol=1e-4), "softmax rows must sum to 1"


if __name__ == "__main__":
    key = jax.random.PRNGKey(0)
    k1, k2 = jax.random.split(key)
    # Small shape consistent with the module; bf16 MXU operands (single-tile grid,
    # lane-padded 16 -> 128).
    _check(B=8, in_dim=32, out_dim=16, block_rows=512, key=k1,
           matmul_dtype=jnp.bfloat16, atol=1e-4)
    # Multi-tile grid with padded batch rows (exercises per-tile partial stats,
    # cross-tile reduction and the parallel grid axis); f32 operand path.
    _check(B=20, in_dim=32, out_dim=16, block_rows=8, key=k2,
           matmul_dtype=jnp.float32, atol=1e-4)
    print("KERNEL_OK")
</pallas_src>

<mosaic_0001>
module attributes {stable_mosaic.version = 11 : i64} {
  func.func @_stats_kernel(%arg0: i32, %arg1: memref<8x32xbf16, #tpu.memory_space<vmem>>, %arg2: memref<32x128xbf16, #tpu.memory_space<vmem>>, %arg3: memref<1x2x128xf32, #tpu.memory_space<vmem>>) attributes {dimension_semantics = [#tpu.dimension_semantics<parallel>], iteration_bounds = array<i64: 1>, scalar_prefetch = 0 : i64, scratch_operands = 0 : i64, tpu.core_type = #tpu.core_type<tc>, window_params = [{transform_indices = @transform_0, window_bounds = array<i64: 8, 32>}, {pipeline_mode = #tpu.pipeline_mode<synchronous>, transform_indices = @transform_1, window_bounds = array<i64: 32, 128>}, {transform_indices = @transform_2, window_bounds = array<i64: 1, 2, 128>}]} {
    %c0 = arith.constant 0 : index
    %c0_0 = arith.constant 0 : index
    %0 = vector.load %arg1[%c0, %c0_0] : memref<8x32xbf16, #tpu.memory_space<vmem>>, vector<8x32xbf16>
    %c0_1 = arith.constant 0 : index
    %c0_2 = arith.constant 0 : index
    %1 = vector.load %arg2[%c0_1, %c0_2] : memref<32x128xbf16, #tpu.memory_space<vmem>>, vector<32x128xbf16>
    %cst = arith.constant dense<0.000000e+00> : vector<8x128xf32>
    %2 = tpu.matmul %0, %1, %cst {dimension_numbers = #tpu.dot_dimension_numbers<[1], [0], [0], [1], [0, 0, 1, 1], [], []>} : vector<8x32xbf16>, vector<32x128xbf16>, vector<8x128xf32> -> vector<8x128xf32>
    %cst_3 = arith.constant dense<0.000000e+00> : vector<128xf32>
    %3 = vector.multi_reduction <add>, %2, %cst_3 [0] : vector<8x128xf32> to vector<128xf32>
    %4 = vector.shape_cast %3 : vector<128xf32> to vector<1x128xf32>
    %c0_4 = arith.constant 0 : index
    %c0_5 = arith.constant 0 : index
    %c0_6 = arith.constant 0 : index
    %5 = vector.load %arg3[%c0_4, %c0_5, %c0_6] : memref<1x2x128xf32, #tpu.memory_space<vmem>>, vector<1x1x128xf32>
    %6 = vector.shape_cast %5 : vector<1x1x128xf32> to vector<1x128xf32>
    %7 = vector.shape_cast %4 : vector<1x128xf32> to vector<1x1x128xf32>
    tpu.vector_store %arg3[%c0_4, %c0_5, %c0_6], %7 {strides = array<i32>} : memref<1x2x128xf32, #tpu.memory_space<vmem>>, vector<1x1x128xf32>,
    %8 = arith.mulf %2, %2 : vector<8x128xf32>
    %cst_7 = arith.constant dense<0.000000e+00> : vector<128xf32>
    %9 = vector.multi_reduction <add>, %8, %cst_7 [0] : vector<8x128xf32> to vector<128xf32>
    %10 = vector.shape_cast %9 : vector<128xf32> to vector<1x128xf32>
    %c0_8 = arith.constant 0 : index
    %c1 = arith.constant 1 : index
    %c0_9 = arith.constant 0 : index
    %11 = vector.load %arg3[%c0_8, %c1, %c0_9] : memref<1x2x128xf32, #tpu.memory_space<vmem>>, vector<1x1x128xf32>
    %12 = vector.shape_cast %11 : vector<1x1x128xf32> to vector<1x128xf32>
    %13 = vector.shape_cast %10 : vector<1x128xf32> to vector<1x1x128xf32>
    tpu.vector_store %arg3[%c0_8, %c1, %c0_9], %13 {strides = array<i32>} : memref<1x2x128xf32, #tpu.memory_space<vmem>>, vector<1x1x128xf32>,
    return
  }
  func.func @transform_0(%arg0: i32) -> (i32, i32) {
    %c0_i32 = arith.constant 0 : i32
    %c0_i32_0 = arith.constant 0 : i32
    return %arg0, %c0_i32 : i32, i32
  }
  func.func @transform_1(%arg0: i32) -> (i32, i32) {
    %c0_i32 = arith.constant 0 : i32
    %c0_i32_0 = arith.constant 0 : i32
    %c0_i32_1 = arith.constant 0 : i32
    return %c0_i32, %c0_i32_0 : i32, i32
  }
  func.func @transform_2(%arg0: i32) -> (i32, i32, i32) {
    %c0_i32 = arith.constant 0 : i32
    %c0_i32_0 = arith.constant 0 : i32
    %c0_i32_1 = arith.constant 0 : i32
    return %arg0, %c0_i32, %c0_i32_0 : i32, i32, i32
  }
}

</mosaic_0001>

<llo_original>
// kernel: tpu_custom_call.1
$region0: #{tpu_custom_call.1}
  #allocation0 [shape = 'u32[]', space=smem, size = 0x4, offset = 0x4, fixed_abs, tag = 'smem constant byte address 0x4 - core index']
  #allocation1 [shape = 'u32[144,128]{1,0:T(1,128)}', space=vmem, size = 0x12000, scoped, tag = 'internal scratch']
  %s0 = inlined_call_operand.hbm [shape: bf16[8,32], index: 0, kind: input, shape index: {}]
  %s1 = inlined_call_operand.hbm [shape: bf16[32,128], index: 1, kind: input, shape index: {}]
  %s2 = inlined_call_operand.hbm [shape: f32[1,2,128], index: 2, kind: output, shape index: {}]
  %s3 = sld [smem:[#allocation0]]
  $region26: #{tpu_custom_call.1} parent=0
    _
  %s5 = ssub.s32 1, %s3
  %s6 = scalar_select 0, %s5, %s3
  $region1: #{tpu_custom_call.1} parent=0
    #allocation2 [shape = 'u8[2048]{0}', space=vmem, size = 0x800, scoped, tag = 'input window, operand 0, single buffered']
    #allocation3 [shape = 's32[1]{0}', space=sflag, size = 0x4, scoped, tag = 'scoped memory for tpu_custom_call.1']
    #allocation4 [shape = 's32[1]{0}', space=sflag, size = 0x4, scoped, tag = 'scoped memory for tpu_custom_call.1']
    #allocation5 [shape = 'u8[8192]{0}', space=vmem, size = 0x2000, scoped, tag = 'input window, operand 1, single buffered']
    #allocation6 [shape = 's32[1]{0}', space=sflag, size = 0x4, scoped, tag = 'scoped memory for tpu_custom_call.1']
    #allocation7 [shape = 'u8[1024]{0}', space=vmem, size = 0x400, scoped, tag = 'output window, operand 0, single buffered']
    %7 = vsyncpa [#allocation3], 0
    %8 = vsyncpa [#allocation6], 0
    %9 = vsyncpa [#allocation4], 0
    // Predicated region
    $region2: #{tpu_custom_call.1} parent=1 // pred_check
      _
    $region3: #{tpu_custom_call.1} parent=1 // pred_check_branch
      %11 = sbr.rel (0) target = $region5
    $region4: #{tpu_custom_call.1} parent=1 // pred_region
      %s13 = ssub.s32 64, 64
      %14 = vsyncadd [#allocation3], %s13
      %s16 = sshll.u32 [#allocation2], 4
      %s17 = int_to_ptr.vmem [resolvable:$true] %s16
      %19 = dma.hbm_to_vmem [thread:$0]  %s0, 64, %s17, [#allocation3]
    $region5: #{tpu_custom_call.1} parent=1 // pred_fallthru
      _
    // Predicated region
    $region6: #{tpu_custom_call.1} parent=1 // pred_check
      _
    $region7: #{tpu_custom_call.1} parent=1 // pred_check_branch
      %21 = sbr.rel (0) target = $region9
    $region8: #{tpu_custom_call.1} parent=1 // pred_region
      %s23 = ssub.s32 256, 256
      %24 = vsyncadd [#allocation6], %s23
      %s25 = sshll.u32 [#allocation5], 4
      %s26 = int_to_ptr.vmem [resolvable:$true] %s25
      %31 = dma.hbm_to_vmem [thread:$0]  %s1, 256, %s26, [#allocation6], 64, 64, 4
    $region9: #{tpu_custom_call.1} parent=1 // pred_fallthru
      _
    // Predicated region
    $region10: #{tpu_custom_call.1} parent=1 // pred_check
      _
    $region11: #{tpu_custom_call.1} parent=1 // pred_check_branch
      %33 = sbr.rel (0) target = $region13
    $region12: #{tpu_custom_call.1} parent=1 // pred_region
      %34 = dma.done [#allocation3], 64
    $region13: #{tpu_custom_call.1} parent=1 // pred_fallthru
      _
    // Predicated region
    $region14: #{tpu_custom_call.1} parent=1 // pred_check
      _
    $region15: #{tpu_custom_call.1} parent=1 // pred_check_branch
      %36 = sbr.rel (0) target = $region17
    $region16: #{tpu_custom_call.1} parent=1 // pred_region
      %37 = dma.done [#allocation6], 256
    $region17: #{tpu_custom_call.1} parent=1 // pred_fallthru
      _
    %v39 = vld [vmem:[#allocation2] sm:$0xf]
    %v40 = vld [vmem:[#allocation5] sm:$0xf]
    %v41 = vld [vmem:[#allocation5 + $0x4] sm:$0xf]
    %v42 = vld [vmem:[#allocation5 + $0x8] sm:$0xf]
    %v43 = vld [vmem:[#allocation5 + $0xc] sm:$0xf]
    %v48 = vunpack.c.l.b16 %v40
    %v49 = vunpack.c.l.b16 %v41
    %v50 = vunpack.c.l.b16 %v42
    %v51 = vunpack.c.l.b16 %v43
    %v52 = vpack.c.b16 %v49, %v48
    %v53 = vpack.c.b16 %v51, %v50
    %vm56 = vcmask 261120
    %v58 = vsel %vm56, %v39, 0
    %60 = vmatprep.subr.bf16.mxu0 0
    %61 = vmatpush1.bf16.msra.mxu0 %v52
    %62 = vmatprep.subr.bf16.mxu0 0
    %63 = vmatpush1.bf16.msra.mxu0 %v53
    %64 = vmatprep.subr.bf16.mxu0 0
    %65 = vmatpush1.bf16.msra.mxu0 0
    %66 = vmatprep.subr.bf16.mxu0 0
    %67 = vmatpush1.bf16.msra.mxu0 0
    %68 = vmatprep.subr.bf16.mxu0 0
    %69 = vmatpush1.bf16.msra.mxu0 0
    %70 = vmatprep.subr.bf16.mxu0 0
    %71 = vmatpush1.bf16.msra.mxu0 0
    %72 = vmatprep.subr.bf16.mxu0 0
    %73 = vmatpush1.bf16.msra.mxu0 0
    %74 = vmatprep.subr.bf16.mxu0 0
    %75 = vmatpush1.bf16.msra.mxu0 0
    %76 = vmatprep.subr.bf16.mxu0 0
    %77 = vmatpush1.bf16.msra.mxu0 0
    %78 = vmatprep.subr.bf16.mxu0 0
    %79 = vmatpush1.bf16.msra.mxu0 0
    %80 = vmatprep.subr.bf16.mxu0 0
    %81 = vmatpush1.bf16.msra.mxu0 0
    %82 = vmatprep.subr.bf16.mxu0 0
    %83 = vmatpush1.bf16.msra.mxu0 0
    %84 = vmatprep.subr.bf16.mxu0 0
    %85 = vmatpush1.bf16.msra.mxu0 0
    %86 = vmatprep.subr.bf16.mxu0 0
    %87 = vmatpush1.bf16.msra.mxu0 0
    %88 = vmatprep.subr.bf16.mxu0 0
    %89 = vmatpush1.bf16.msra.mxu0 0
    %90 = vmatprep.subr.bf16.mxu0 0
    %91 = vmatpush1.bf16.msra.mxu0 0
    %92 = vmatprep.mubr.bf16.mxu0 0
    %93 = vmatmul.mubr.bf16.gmra.mrb[0].mxu0 %v58
    %v94 = vpop.f32.mrb[0].mxu0
    %v95 = vadd.f32 0.0, %v94
    %v96 = vpop.f32.mrb[0].mxu0
    %v97 = vpop.f32.mrb[0].mxu0
    %v98 = vpop.f32.mrb[0].mxu0
    %99 = vdwg.mxu0
    %v100 = vrot.slane %v95, 4
    %v101 = vadd.f32 %v95, %v100
    %v102 = vrot.slane %v101, 2
    %v103 = vadd.f32 %v101, %v102
    %v104 = vrot.slane %v103, 1
    %v105 = vadd.f32 %v103, %v104
    %106 = vst [vmem:[#allocation7] sm:$0x1] %v105
    %v107 = vmul.f32 %v95, %v95
    %v108 = vrot.slane %v107, 4
    %v109 = vadd.f32 %v107, %v108
    %v110 = vrot.slane %v109, 2
    %v111 = vadd.f32 %v109, %v110
    %v112 = vrot.slane %v111, 1
    %v113 = vadd.f32 %v111, %v112
    %114 = vst [vmem:[#allocation7 + $0x1] sm:$0x1] %v113
    // Predicated region
    $region18: #{tpu_custom_call.1} parent=1 // pred_check
      _
    $region19: #{tpu_custom_call.1} parent=1 // pred_check_branch
      %116 = sbr.rel (0) target = $region21
    $region20: #{tpu_custom_call.1} parent=1 // pred_region
      %s118 = ssub.s32 32, 32
      %119 = vsyncadd [#allocation4], %s118
      %s121 = sshll.u32 [#allocation7], 4
      %s122 = int_to_ptr.vmem [resolvable:$true] %s121
      %124 = dma.vmem_to_hbm [thread:$0]  %s122, 32, %s2, [#allocation4]
    $region21: #{tpu_custom_call.1} parent=1 // pred_fallthru
      _
    // Predicated region
    $region22: #{tpu_custom_call.1} parent=1 // pred_check
      _
    $region23: #{tpu_custom_call.1} parent=1 // pred_check_branch
      %126 = sbr.rel (0) target = $region25
    $region24: #{tpu_custom_call.1} parent=1 // pred_region
      %127 = dma.done [#allocation4], 32
    $region25: #{tpu_custom_call.1} parent=1 // pred_fallthru
      _
    %128 = vsyncpa [#allocation3], 1
    %129 = vsyncpa [#allocation6], 1
    %130 = vsyncpa [#allocation4], 1

</llo_original>
